<compile_context>
chip_gen: v7x
topology: tpu7x:2x2x1
jax: 0.10.0
libtpu: 0.0.40
codegen_flags: <defaults>
</compile_context>

<pallas_src>
import functools

import jax
import jax.numpy as jnp
from jax import lax
from jax.experimental import pallas as pl
from jax.experimental.pallas import tpu as pltpu


# ----------------------------------------------------------------------------
# Fused Pallas kernel: all layers + head, activations resident in VMEM.
# ----------------------------------------------------------------------------
def _fused_forward_kernel(*refs, num_layers, B, T, D):
    """refs = [xcol0, last_sel, (M2, cb, W, lb) * num_layers, Wout, bout, out]."""
    xcol_ref, sel_ref = refs[0], refs[1]
    layer_refs = refs[2:2 + 4 * num_layers]
    wout_ref, bout_ref, out_ref = refs[2 + 4 * num_layers:]

    BT = B * T
    # Time-within-sequence index of every lane column; used to causally mask
    # rolled copies (also zeroes lanes that would bleed across batch borders).
    t_idx = lax.broadcasted_iota(jnp.int32, (1, BT), 1) % T
    sel = sel_ref[...]                                     # (B*T, B) bf16 0/1

    xcol = xcol_ref[...]                                   # (C_in*D, B*T) f32
    y_last = None
    for i in range(num_layers):
        m2 = layer_refs[4 * i][...]                        # (C_out, C_in*D)
        cb = layer_refs[4 * i + 1][...]                    # (C_out, 1)
        w = layer_refs[4 * i + 2][...]                     # (C_out, C_out)
        lb = layer_refs[4 * i + 3][...]                    # (C_out, 1)
        is_last = i == num_layers - 1

        if is_last:
            # Only the last timestep of each sequence reaches the head and the
            # remaining ops are per-timestep, so selection commutes with the
            # conv / bias / ReLU: pick the B last-timestep im2col columns now
            # and run the final layer at N=B instead of N=B*T.
            xcol = jnp.dot(xcol.astype(jnp.bfloat16), sel,
                           preferred_element_type=jnp.float32)   # (C_in*D, B)

        # TCTCT layer: causal conv as ONE im2col matmul (K = C_in*D) + bias + ReLU.
        acc = jnp.dot(m2.astype(jnp.bfloat16), xcol.astype(jnp.bfloat16),
                      preferred_element_type=jnp.float32) + cb
        h = jnp.maximum(acc, 0.0)
        # transform_linears[i] + ReLU (channel mixing, all columns at once).
        y = jnp.dot(w.astype(jnp.bfloat16), h.astype(jnp.bfloat16),
                    preferred_element_type=jnp.float32) + lb
        y = jnp.maximum(y, 0.0)                            # (C_out, N) f32

        if is_last:
            y_last = y                                     # (C_last, B)
        else:
            # Next layer's im2col, built in VMEM: row (d*C_out + f) holds
            # y[f, t-d] (0 for t < d).  Lane rotations run on the XLU.
            cols = [y]
            for d in range(1, D):
                shifted = pltpu.roll(y, shift=d, axis=1)
                cols.append(jnp.where(t_idx >= d, shifted,
                                      jnp.zeros_like(shifted)))
            xcol = jnp.concatenate(cols, axis=0)           # (C_out*D, B*T)

    # Output head (to_out) on the per-sequence last-timestep activations.
    out_ref[...] = (jnp.dot(wout_ref[...].astype(jnp.bfloat16),
                            y_last.astype(jnp.bfloat16),
                            preferred_element_type=jnp.float32)
                    + bout_ref[...])                       # (n_cls, B)


# ----------------------------------------------------------------------------
# pallas_call wrapper
# ----------------------------------------------------------------------------
def _full_spec(shape):
    nd = len(shape)
    return pl.BlockSpec(shape, lambda i: (0,) * nd)


def sithcon_forward(inp, params):
    """inp: (batch, num_channels=1, num_features, seq_len).
    collate='batch', seqloss=False -> logits at the last timestep, (B, classes)."""
    x = inp[:, 0, :, :]                                   # squeeze channel dim
    B, C0, T = x.shape
    D = params["D"]
    num_layers = len(params["layers"])
    n_classes = params["Wout"].shape[0]
    BT = B * T

    # Glue: layer-1 im2col slab, rows ordered (d, f), lanes ordered (b, t).
    xp = jnp.pad(x, ((0, 0), (0, 0), (D - 1, 0)))         # causal left pad
    xcol0 = jnp.stack([xp[:, :, D - 1 - d: D - 1 - d + T] for d in range(D)],
                      axis=0)                             # (D, B, C0, T)
    xcol0 = xcol0.transpose(0, 2, 1, 3).reshape(D * C0, B * T)

    # 0/1 selector that picks lane column b*T + (T-1) for every sequence b
    # (built host-side, bf16 so it feeds the MXU directly).
    sel = (jnp.arange(BT)[:, None]
           == (jnp.arange(B)[None, :] * T + (T - 1))).astype(jnp.bfloat16)

    args = [xcol0, sel]
    for layer in params["layers"]:
        args.extend(layer)
    args += [params["Wout"], params["bout"]]

    flops = 0
    for li, (M2, _, W, _) in enumerate(params["layers"]):
        n_cols = B if li == num_layers - 1 else BT
        flops += 2 * n_cols * (M2.shape[0] * M2.shape[1] + W.shape[0] * W.shape[1])
        if li == num_layers - 1:
            flops += 2 * B * BT * M2.shape[1]             # last-step selection
    flops += 2 * B * n_classes * params["Wout"].shape[1]
    bytes_accessed = (sum(int(a.size) * a.dtype.itemsize for a in args)
                      + n_classes * B * 4)

    kernel = functools.partial(_fused_forward_kernel, num_layers=num_layers,
                               B=B, T=T, D=D)
    out = pl.pallas_call(
        kernel,
        out_shape=jax.ShapeDtypeStruct((n_classes, B), jnp.float32),
        grid=(1,),
        in_specs=[_full_spec(a.shape) for a in args],
        out_specs=_full_spec((n_classes, B)),
        compiler_params=pltpu.CompilerParams(dimension_semantics=("arbitrary",)),
        cost_estimate=pl.CostEstimate(flops=flops, transcendentals=0,
                                      bytes_accessed=bytes_accessed),
    )(*args)
    return out.T                                          # (B, n_classes)


# ----------------------------------------------------------------------------
# Pure-JAX reference mirroring the same math (validates the Pallas path).
# matmul_dtype=bfloat16 reproduces the kernel's bf16-operand/f32-accumulate
# MXU matmuls; float32 gives the full-precision forward for a sanity check.
# ----------------------------------------------------------------------------
def reference_forward(inp, params, matmul_dtype=jnp.float32):
    x = inp[:, 0, :, :].astype(jnp.float32)
    B, C, T = x.shape
    D = params["D"]
    c = lambda a: a.astype(matmul_dtype)
    for (M2, cb, W, lb) in params["layers"]:
        xp = jnp.pad(x, ((0, 0), (0, 0), (D - 1, 0)))
        xcol = jnp.stack([xp[:, :, D - 1 - d: D - 1 - d + T] for d in range(D)],
                         axis=1).reshape(B, D * C, T)
        h = jnp.maximum(jnp.einsum("ok,bkt->bot", c(M2), c(xcol),
                                   preferred_element_type=jnp.float32)
                        + cb[None], 0.0)
        x = jnp.maximum(jnp.einsum("op,bpt->bot", c(W), c(h),
                                   preferred_element_type=jnp.float32)
                        + lb[None], 0.0)
        C = x.shape[1]
    x_last = x[:, :, -1]                                   # out[:, -1]
    return (jnp.einsum("oc,bc->bo", c(params["Wout"]), c(x_last),
                       preferred_element_type=jnp.float32)
            + params["bout"][:, 0][None])


# ----------------------------------------------------------------------------
# Deterministic parameter construction
# ----------------------------------------------------------------------------
def make_sith_basis(ntau, D):
    # log-spaced exponential-decay temporal filters (SITH-flavored), fixed.
    taus = jnp.exp(jnp.linspace(jnp.log(1.0), jnp.log(float(D)), ntau))
    d = jnp.arange(D, dtype=jnp.float32)
    w = jnp.exp(-d[None, :] / taus[:, None])
    return w / jnp.sum(w, axis=1, keepdims=True)          # (ntau, D)


def kaiming(key, shape, fan_in):
    return jax.random.normal(key, shape, jnp.float32) * jnp.sqrt(2.0 / fan_in)


def build_params(key, in_features, channels, ntau, D, n_classes):
    sith = make_sith_basis(ntau, D)                        # (ntau, D)
    layers = []
    c_in = in_features
    for c_out in channels:
        key, k1, k2, k3, k4 = jax.random.split(key, 5)
        # Conv2d weight (C_out, ntau, C_in); kaiming_normal_ per init_weights()
        CW = kaiming(k1, (c_out, ntau, c_in), ntau * c_in)
        cb = jax.random.uniform(k2, (c_out, 1), jnp.float32,
                                -1.0, 1.0) / jnp.sqrt(ntau * c_in)
        # Effective causal kernel in im2col layout: M2[o, d*c_in + f]
        M = jnp.einsum("okf,kd->dof", CW, sith)            # (D, c_out, c_in)
        M2 = M.transpose(1, 0, 2).reshape(c_out, D * c_in)
        # transform_linears[i]: Linear(c_out, c_out)
        W = kaiming(k3, (c_out, c_out), c_out)
        lb = jax.random.uniform(k4, (c_out, 1), jnp.float32,
                                -1.0, 1.0) / jnp.sqrt(c_out)
        layers.append((M2, cb, W, lb))
        c_in = c_out
    key, k5, k6 = jax.random.split(key, 3)
    Wout = kaiming(k5, (n_classes, channels[-1]), channels[-1])
    bout = jax.random.uniform(k6, (n_classes, 1), jnp.float32,
                              -1.0, 1.0) / jnp.sqrt(channels[-1])
    return {"layers": layers, "Wout": Wout, "bout": bout, "D": D}


# ----------------------------------------------------------------------------
if __name__ == "__main__":
    B, F, T = 2, 16, 64            # batch, num_features, seq_length
    channels = [32, 32]            # layer_params[i]['channels']
    ntau, D = 8, 8                 # synthetic SITH taus / temporal support
    n_classes = 4

    key = jax.random.PRNGKey(0)
    key, kx = jax.random.split(key)
    # PyTorch input: (batch, num_channels=1, num_features, seq_length)
    x = jax.random.normal(kx, (B, 1, F, T), jnp.float32)

    params = build_params(key, F, channels, ntau, D, n_classes)

    fwd = jax.jit(lambda xx: sithcon_forward(xx, params))
    out = fwd(x)
    jax.block_until_ready(out)
    assert out.shape == (B, n_classes), out.shape

    # Tight check vs a reference that mirrors the kernel's bf16-operand /
    # f32-accumulate matmuls, plus a loose check vs full-f32 math.
    ref_matched = reference_forward(x, params, matmul_dtype=jnp.bfloat16)
    ref_f32 = reference_forward(x, params, matmul_dtype=jnp.float32)
    assert jnp.allclose(out, ref_matched, rtol=5e-3, atol=5e-3), (out, ref_matched)
    assert jnp.allclose(out, ref_f32, rtol=7e-2, atol=7e-2), (out, ref_f32)

    print("KERNEL_OK")
</pallas_src>

<mosaic_0001>
module attributes {stable_mosaic.version = 11 : i64} {
  func.func @_fused_forward_kernel(%arg0: i32, %arg1: memref<128x128xf32, #tpu.memory_space<vmem>>, %arg2: memref<128x2xbf16, #tpu.memory_space<vmem>>, %arg3: memref<32x128xf32, #tpu.memory_space<vmem>>, %arg4: memref<32x1xf32, #tpu.memory_space<vmem>>, %arg5: memref<32x32xf32, #tpu.memory_space<vmem>>, %arg6: memref<32x1xf32, #tpu.memory_space<vmem>>, %arg7: memref<32x256xf32, #tpu.memory_space<vmem>>, %arg8: memref<32x1xf32, #tpu.memory_space<vmem>>, %arg9: memref<32x32xf32, #tpu.memory_space<vmem>>, %arg10: memref<32x1xf32, #tpu.memory_space<vmem>>, %arg11: memref<4x32xf32, #tpu.memory_space<vmem>>, %arg12: memref<4x1xf32, #tpu.memory_space<vmem>>, %arg13: memref<4x2xf32, #tpu.memory_space<vmem>>) attributes {dimension_semantics = [#tpu.dimension_semantics<arbitrary>], iteration_bounds = array<i64: 1>, scalar_prefetch = 0 : i64, scratch_operands = 0 : i64, tpu.core_type = #tpu.core_type<tc>, window_params = [{pipeline_mode = #tpu.pipeline_mode<synchronous>, transform_indices = @transform_0, window_bounds = array<i64: 128, 128>}, {pipeline_mode = #tpu.pipeline_mode<synchronous>, transform_indices = @transform_1, window_bounds = array<i64: 128, 2>}, {pipeline_mode = #tpu.pipeline_mode<synchronous>, transform_indices = @transform_2, window_bounds = array<i64: 32, 128>}, {pipeline_mode = #tpu.pipeline_mode<synchronous>, transform_indices = @transform_3, window_bounds = array<i64: 32, 1>}, {pipeline_mode = #tpu.pipeline_mode<synchronous>, transform_indices = @transform_4, window_bounds = array<i64: 32, 32>}, {pipeline_mode = #tpu.pipeline_mode<synchronous>, transform_indices = @transform_5, window_bounds = array<i64: 32, 1>}, {pipeline_mode = #tpu.pipeline_mode<synchronous>, transform_indices = @transform_6, window_bounds = array<i64: 32, 256>}, {pipeline_mode = #tpu.pipeline_mode<synchronous>, transform_indices = @transform_7, window_bounds = array<i64: 32, 1>}, {pipeline_mode = #tpu.pipeline_mode<synchronous>, transform_indices = @transform_8, window_bounds = array<i64: 32, 32>}, {pipeline_mode = #tpu.pipeline_mode<synchronous>, transform_indices = @transform_9, window_bounds = array<i64: 32, 1>}, {pipeline_mode = #tpu.pipeline_mode<synchronous>, transform_indices = @transform_10, window_bounds = array<i64: 4, 32>}, {pipeline_mode = #tpu.pipeline_mode<synchronous>, transform_indices = @transform_11, window_bounds = array<i64: 4, 1>}, {pipeline_mode = #tpu.pipeline_mode<synchronous>, transform_indices = @transform_12, window_bounds = array<i64: 4, 2>}]} {
    %0 = tpu.iota {dimensions = array<i32: 1>} : vector<1x128xi32>
    %c64_i32 = arith.constant 64 : i32
    %c0_i32 = arith.constant 0 : i32
    %1 = arith.cmpi eq, %c64_i32, %c0_i32 : i32
    %c1_i32 = arith.constant 1 : i32
    %2 = arith.select %1, %c1_i32, %c64_i32 : i32
    %3 = vector.broadcast %2 : i32 to vector<1x128xi32>
    %4 = arith.remsi %0, %3 : vector<1x128xi32>
    %c0_i32_0 = arith.constant 0 : i32
    %5 = vector.broadcast %c0_i32_0 : i32 to vector<1x128xi32>
    %6 = arith.cmpi ne, %4, %5 : vector<1x128xi32>
    %c0_i32_1 = arith.constant 0 : i32
    %7 = vector.broadcast %c0_i32_1 : i32 to vector<1x128xi32>
    %8 = arith.cmpi slt, %4, %7 : vector<1x128xi32>
    %c0_i32_2 = arith.constant 0 : i32
    %9 = arith.cmpi slt, %2, %c0_i32_2 : i32
    %10 = vector.broadcast %9 : i1 to vector<1x128xi1>
    %11 = vector.broadcast %10 : vector<1x128xi1> to vector<1x128xi1>
    %12 = arith.xori %8, %11 : vector<1x128xi1>
    %13 = arith.andi %12, %6 : vector<1x128xi1>
    %14 = vector.broadcast %2 : i32 to vector<1x128xi32>
    %15 = arith.addi %4, %14 : vector<1x128xi32>
    %16 = arith.select %13, %15, %4 : vector<1x128xi1>, vector<1x128xi32>
    %c0 = arith.constant 0 : index
    %c0_3 = arith.constant 0 : index
    %17 = vector.load %arg2[%c0, %c0_3] : memref<128x2xbf16, #tpu.memory_space<vmem>>, vector<128x2xbf16>
    %c0_4 = arith.constant 0 : index
    %c0_5 = arith.constant 0 : index
    %18 = vector.load %arg1[%c0_4, %c0_5] : memref<128x128xf32, #tpu.memory_space<vmem>>, vector<128x128xf32>
    %c0_6 = arith.constant 0 : index
    %c0_7 = arith.constant 0 : index
    %19 = vector.load %arg3[%c0_6, %c0_7] : memref<32x128xf32, #tpu.memory_space<vmem>>, vector<32x128xf32>
    %c0_8 = arith.constant 0 : index
    %c0_9 = arith.constant 0 : index
    %20 = vector.load %arg4[%c0_8, %c0_9] : memref<32x1xf32, #tpu.memory_space<vmem>>, vector<32x1xf32>
    %c0_10 = arith.constant 0 : index
    %c0_11 = arith.constant 0 : index
    %21 = vector.load %arg5[%c0_10, %c0_11] : memref<32x32xf32, #tpu.memory_space<vmem>>, vector<32x32xf32>
    %c0_12 = arith.constant 0 : index
    %c0_13 = arith.constant 0 : index
    %22 = vector.load %arg6[%c0_12, %c0_13] : memref<32x1xf32, #tpu.memory_space<vmem>>, vector<32x1xf32>
    %23 = arith.truncf %19 : vector<32x128xf32> to vector<32x128xbf16>
    %24 = arith.truncf %18 : vector<128x128xf32> to vector<128x128xbf16>
    %cst = arith.constant dense<0.000000e+00> : vector<32x128xf32>
    %25 = tpu.matmul %23, %24, %cst {dimension_numbers = #tpu.dot_dimension_numbers<[1], [0], [0], [1], [0, 0, 1, 1], [], []>} : vector<32x128xbf16>, vector<128x128xbf16>, vector<32x128xf32> -> vector<32x128xf32>
    %26 = vector.broadcast %20 : vector<32x1xf32> to vector<32x128xf32>
    %27 = arith.addf %25, %26 : vector<32x128xf32>
    %cst_14 = arith.constant 0.000000e+00 : f32
    %28 = vector.broadcast %cst_14 : f32 to vector<32x128xf32>
    %29 = arith.maximumf %27, %28 : vector<32x128xf32>
    %30 = arith.truncf %21 : vector<32x32xf32> to vector<32x32xbf16>
    %31 = arith.truncf %29 : vector<32x128xf32> to vector<32x128xbf16>
    %cst_15 = arith.constant dense<0.000000e+00> : vector<32x128xf32>
    %32 = tpu.matmul %30, %31, %cst_15 {dimension_numbers = #tpu.dot_dimension_numbers<[1], [0], [0], [1], [0, 0, 1, 1], [], []>} : vector<32x32xbf16>, vector<32x128xbf16>, vector<32x128xf32> -> vector<32x128xf32>
    %33 = vector.broadcast %22 : vector<32x1xf32> to vector<32x128xf32>
    %34 = arith.addf %32, %33 : vector<32x128xf32>
    %cst_16 = arith.constant 0.000000e+00 : f32
    %35 = vector.broadcast %cst_16 : f32 to vector<32x128xf32>
    %36 = arith.maximumf %34, %35 : vector<32x128xf32>
    %c1_i32_17 = arith.constant 1 : i32
    %37 = tpu.dynamic_rotate %36 by %c1_i32_17 dim 1 : vector<32x128xf32>, i32 -> vector<32x128xf32>
    %c1_i32_18 = arith.constant 1 : i32
    %38 = vector.broadcast %c1_i32_18 : i32 to vector<1x128xi32>
    %39 = arith.cmpi sge, %16, %38 : vector<1x128xi32>
    %cst_19 = arith.constant 0.000000e+00 : f32
    %40 = vector.broadcast %cst_19 : f32 to vector<32x128xf32>
    %41 = vector.shape_cast %39 : vector<1x128xi1> to vector<1x128xi1>
    %42 = vector.broadcast %41 : vector<1x128xi1> to vector<32x128xi1>
    %43 = arith.select %42, %37, %40 : vector<32x128xi1>, vector<32x128xf32>
    %c2_i32 = arith.constant 2 : i32
    %44 = tpu.dynamic_rotate %36 by %c2_i32 dim 1 : vector<32x128xf32>, i32 -> vector<32x128xf32>
    %c2_i32_20 = arith.constant 2 : i32
    %45 = vector.broadcast %c2_i32_20 : i32 to vector<1x128xi32>
    %46 = arith.cmpi sge, %16, %45 : vector<1x128xi32>
    %cst_21 = arith.constant 0.000000e+00 : f32
    %47 = vector.broadcast %cst_21 : f32 to vector<32x128xf32>
    %48 = vector.shape_cast %46 : vector<1x128xi1> to vector<1x128xi1>
    %49 = vector.broadcast %48 : vector<1x128xi1> to vector<32x128xi1>
    %50 = arith.select %49, %44, %47 : vector<32x128xi1>, vector<32x128xf32>
    %c3_i32 = arith.constant 3 : i32
    %51 = tpu.dynamic_rotate %36 by %c3_i32 dim 1 : vector<32x128xf32>, i32 -> vector<32x128xf32>
    %c3_i32_22 = arith.constant 3 : i32
    %52 = vector.broadcast %c3_i32_22 : i32 to vector<1x128xi32>
    %53 = arith.cmpi sge, %16, %52 : vector<1x128xi32>
    %cst_23 = arith.constant 0.000000e+00 : f32
    %54 = vector.broadcast %cst_23 : f32 to vector<32x128xf32>
    %55 = vector.shape_cast %53 : vector<1x128xi1> to vector<1x128xi1>
    %56 = vector.broadcast %55 : vector<1x128xi1> to vector<32x128xi1>
    %57 = arith.select %56, %51, %54 : vector<32x128xi1>, vector<32x128xf32>
    %c4_i32 = arith.constant 4 : i32
    %58 = tpu.dynamic_rotate %36 by %c4_i32 dim 1 : vector<32x128xf32>, i32 -> vector<32x128xf32>
    %c4_i32_24 = arith.constant 4 : i32
    %59 = vector.broadcast %c4_i32_24 : i32 to vector<1x128xi32>
    %60 = arith.cmpi sge, %16, %59 : vector<1x128xi32>
    %cst_25 = arith.constant 0.000000e+00 : f32
    %61 = vector.broadcast %cst_25 : f32 to vector<32x128xf32>
    %62 = vector.shape_cast %60 : vector<1x128xi1> to vector<1x128xi1>
    %63 = vector.broadcast %62 : vector<1x128xi1> to vector<32x128xi1>
    %64 = arith.select %63, %58, %61 : vector<32x128xi1>, vector<32x128xf32>
    %c5_i32 = arith.constant 5 : i32
    %65 = tpu.dynamic_rotate %36 by %c5_i32 dim 1 : vector<32x128xf32>, i32 -> vector<32x128xf32>
    %c5_i32_26 = arith.constant 5 : i32
    %66 = vector.broadcast %c5_i32_26 : i32 to vector<1x128xi32>
    %67 = arith.cmpi sge, %16, %66 : vector<1x128xi32>
    %cst_27 = arith.constant 0.000000e+00 : f32
    %68 = vector.broadcast %cst_27 : f32 to vector<32x128xf32>
    %69 = vector.shape_cast %67 : vector<1x128xi1> to vector<1x128xi1>
    %70 = vector.broadcast %69 : vector<1x128xi1> to vector<32x128xi1>
    %71 = arith.select %70, %65, %68 : vector<32x128xi1>, vector<32x128xf32>
    %c6_i32 = arith.constant 6 : i32
    %72 = tpu.dynamic_rotate %36 by %c6_i32 dim 1 : vector<32x128xf32>, i32 -> vector<32x128xf32>
    %c6_i32_28 = arith.constant 6 : i32
    %73 = vector.broadcast %c6_i32_28 : i32 to vector<1x128xi32>
    %74 = arith.cmpi sge, %16, %73 : vector<1x128xi32>
    %cst_29 = arith.constant 0.000000e+00 : f32
    %75 = vector.broadcast %cst_29 : f32 to vector<32x128xf32>
    %76 = vector.shape_cast %74 : vector<1x128xi1> to vector<1x128xi1>
    %77 = vector.broadcast %76 : vector<1x128xi1> to vector<32x128xi1>
    %78 = arith.select %77, %72, %75 : vector<32x128xi1>, vector<32x128xf32>
    %c7_i32 = arith.constant 7 : i32
    %79 = tpu.dynamic_rotate %36 by %c7_i32 dim 1 : vector<32x128xf32>, i32 -> vector<32x128xf32>
    %c7_i32_30 = arith.constant 7 : i32
    %80 = vector.broadcast %c7_i32_30 : i32 to vector<1x128xi32>
    %81 = arith.cmpi sge, %16, %80 : vector<1x128xi32>
    %cst_31 = arith.constant 0.000000e+00 : f32
    %82 = vector.broadcast %cst_31 : f32 to vector<32x128xf32>
    %83 = vector.shape_cast %81 : vector<1x128xi1> to vector<1x128xi1>
    %84 = vector.broadcast %83 : vector<1x128xi1> to vector<32x128xi1>
    %85 = arith.select %84, %79, %82 : vector<32x128xi1>, vector<32x128xf32>
    %86 = tpu.concatenate %36, %43, %50, %57, %64, %71, %78, %85 in 0 : vector<32x128xf32>, vector<32x128xf32>, vector<32x128xf32>, vector<32x128xf32>, vector<32x128xf32>, vector<32x128xf32>, vector<32x128xf32>, vector<32x128xf32> -> vector<256x128xf32>
    %c0_32 = arith.constant 0 : index
    %c0_33 = arith.constant 0 : index
    %87 = vector.load %arg7[%c0_32, %c0_33] : memref<32x256xf32, #tpu.memory_space<vmem>>, vector<32x256xf32>
    %c0_34 = arith.constant 0 : index
    %c0_35 = arith.constant 0 : index
    %88 = vector.load %arg8[%c0_34, %c0_35] : memref<32x1xf32, #tpu.memory_space<vmem>>, vector<32x1xf32>
    %c0_36 = arith.constant 0 : index
    %c0_37 = arith.constant 0 : index
    %89 = vector.load %arg9[%c0_36, %c0_37] : memref<32x32xf32, #tpu.memory_space<vmem>>, vector<32x32xf32>
    %c0_38 = arith.constant 0 : index
    %c0_39 = arith.constant 0 : index
    %90 = vector.load %arg10[%c0_38, %c0_39] : memref<32x1xf32, #tpu.memory_space<vmem>>, vector<32x1xf32>
    %91 = arith.truncf %86 : vector<256x128xf32> to vector<256x128xbf16>
    %cst_40 = arith.constant dense<0.000000e+00> : vector<256x2xf32>
    %92 = tpu.matmul %91, %17, %cst_40 {dimension_numbers = #tpu.dot_dimension_numbers<[1], [0], [0], [1], [0, 0, 1, 1], [], []>} : vector<256x128xbf16>, vector<128x2xbf16>, vector<256x2xf32> -> vector<256x2xf32>
    %93 = arith.truncf %87 : vector<32x256xf32> to vector<32x256xbf16>
    %94 = arith.truncf %92 : vector<256x2xf32> to vector<256x2xbf16>
    %cst_41 = arith.constant dense<0.000000e+00> : vector<32x2xf32>
    %95 = tpu.matmul %93, %94, %cst_41 {dimension_numbers = #tpu.dot_dimension_numbers<[1], [0], [0], [1], [0, 0, 1, 1], [], []>} : vector<32x256xbf16>, vector<256x2xbf16>, vector<32x2xf32> -> vector<32x2xf32>
    %96 = vector.broadcast %88 : vector<32x1xf32> to vector<32x2xf32>
    %97 = arith.addf %95, %96 : vector<32x2xf32>
    %cst_42 = arith.constant 0.000000e+00 : f32
    %98 = vector.broadcast %cst_42 : f32 to vector<32x2xf32>
    %99 = arith.maximumf %97, %98 : vector<32x2xf32>
    %100 = arith.truncf %89 : vector<32x32xf32> to vector<32x32xbf16>
    %101 = arith.truncf %99 : vector<32x2xf32> to vector<32x2xbf16>
    %cst_43 = arith.constant dense<0.000000e+00> : vector<32x2xf32>
    %102 = tpu.matmul %100, %101, %cst_43 {dimension_numbers = #tpu.dot_dimension_numbers<[1], [0], [0], [1], [0, 0, 1, 1], [], []>} : vector<32x32xbf16>, vector<32x2xbf16>, vector<32x2xf32> -> vector<32x2xf32>
    %103 = vector.broadcast %90 : vector<32x1xf32> to vector<32x2xf32>
    %104 = arith.addf %102, %103 : vector<32x2xf32>
    %cst_44 = arith.constant 0.000000e+00 : f32
    %105 = vector.broadcast %cst_44 : f32 to vector<32x2xf32>
    %106 = arith.maximumf %104, %105 : vector<32x2xf32>
    %c0_45 = arith.constant 0 : index
    %c0_46 = arith.constant 0 : index
    %107 = vector.load %arg11[%c0_45, %c0_46] : memref<4x32xf32, #tpu.memory_space<vmem>>, vector<4x32xf32>
    %108 = arith.truncf %107 : vector<4x32xf32> to vector<4x32xbf16>
    %109 = arith.truncf %106 : vector<32x2xf32> to vector<32x2xbf16>
    %cst_47 = arith.constant dense<0.000000e+00> : vector<4x2xf32>
    %110 = tpu.matmul %108, %109, %cst_47 {dimension_numbers = #tpu.dot_dimension_numbers<[1], [0], [0], [1], [0, 0, 1, 1], [], []>} : vector<4x32xbf16>, vector<32x2xbf16>, vector<4x2xf32> -> vector<4x2xf32>
    %c0_48 = arith.constant 0 : index
    %c0_49 = arith.constant 0 : index
    %111 = vector.load %arg12[%c0_48, %c0_49] : memref<4x1xf32, #tpu.memory_space<vmem>>, vector<4x1xf32>
    %112 = vector.broadcast %111 : vector<4x1xf32> to vector<4x2xf32>
    %113 = arith.addf %110, %112 : vector<4x2xf32>
    %c0_50 = arith.constant 0 : index
    %c0_51 = arith.constant 0 : index
    %114 = vector.load %arg13[%c0_50, %c0_51] : memref<4x2xf32, #tpu.memory_space<vmem>>, vector<4x2xf32>
    tpu.vector_store %arg13[%c0_50, %c0_51], %113 {strides = array<i32>} : memref<4x2xf32, #tpu.memory_space<vmem>>, vector<4x2xf32>,
    return
  }
  func.func @transform_0(%arg0: i32) -> (i32, i32) {
    %c0_i32 = arith.constant 0 : i32
    %c0_i32_0 = arith.constant 0 : i32
    %c0_i32_1 = arith.constant 0 : i32
    return %c0_i32, %c0_i32_0 : i32, i32
  }
  func.func @transform_1(%arg0: i32) -> (i32, i32) {
    %c0_i32 = arith.constant 0 : i32
    %c0_i32_0 = arith.constant 0 : i32
    %c0_i32_1 = arith.constant 0 : i32
    return %c0_i32, %c0_i32_0 : i32, i32
  }
  func.func @transform_2(%arg0: i32) -> (i32, i32) {
    %c0_i32 = arith.constant 0 : i32
    %c0_i32_0 = arith.constant 0 : i32
    %c0_i32_1 = arith.constant 0 : i32
    return %c0_i32, %c0_i32_0 : i32, i32
  }
  func.func @transform_3(%arg0: i32) -> (i32, i32) {
    %c0_i32 = arith.constant 0 : i32
    %c0_i32_0 = arith.constant 0 : i32
    %c0_i32_1 = arith.constant 0 : i32
    return %c0_i32, %c0_i32_0 : i32, i32
  }
  func.func @transform_4(%arg0: i32) -> (i32, i32) {
    %c0_i32 = arith.constant 0 : i32
    %c0_i32_0 = arith.constant 0 : i32
    %c0_i32_1 = arith.constant 0 : i32
    return %c0_i32, %c0_i32_0 : i32, i32
  }
  func.func @transform_5(%arg0: i32) -> (i32, i32) {
    %c0_i32 = arith.constant 0 : i32
    %c0_i32_0 = arith.constant 0 : i32
    %c0_i32_1 = arith.constant 0 : i32
    return %c0_i32, %c0_i32_0 : i32, i32
  }
  func.func @transform_6(%arg0: i32) -> (i32, i32) {
    %c0_i32 = arith.constant 0 : i32
    %c0_i32_0 = arith.constant 0 : i32
    %c0_i32_1 = arith.constant 0 : i32
    return %c0_i32, %c0_i32_0 : i32, i32
  }
  func.func @transform_7(%arg0: i32) -> (i32, i32) {
    %c0_i32 = arith.constant 0 : i32
    %c0_i32_0 = arith.constant 0 : i32
    %c0_i32_1 = arith.constant 0 : i32
    return %c0_i32, %c0_i32_0 : i32, i32
  }
  func.func @transform_8(%arg0: i32) -> (i32, i32) {
    %c0_i32 = arith.constant 0 : i32
    %c0_i32_0 = arith.constant 0 : i32
    %c0_i32_1 = arith.constant 0 : i32
    return %c0_i32, %c0_i32_0 : i32, i32
  }
  func.func @transform_9(%arg0: i32) -> (i32, i32) {
    %c0_i32 = arith.constant 0 : i32
    %c0_i32_0 = arith.constant 0 : i32
    %c0_i32_1 = arith.constant 0 : i32
    return %c0_i32, %c0_i32_0 : i32, i32
  }
  func.func @transform_10(%arg0: i32) -> (i32, i32) {
    %c0_i32 = arith.constant 0 : i32
    %c0_i32_0 = arith.constant 0 : i32
    %c0_i32_1 = arith.constant 0 : i32
    return %c0_i32, %c0_i32_0 : i32, i32
  }
  func.func @transform_11(%arg0: i32) -> (i32, i32) {
    %c0_i32 = arith.constant 0 : i32
    %c0_i32_0 = arith.constant 0 : i32
    %c0_i32_1 = arith.constant 0 : i32
    return %c0_i32, %c0_i32_0 : i32, i32
  }
  func.func @transform_12(%arg0: i32) -> (i32, i32) {
    %c0_i32 = arith.constant 0 : i32
    %c0_i32_0 = arith.constant 0 : i32
    %c0_i32_1 = arith.constant 0 : i32
    return %c0_i32, %c0_i32_0 : i32, i32
  }
}

</mosaic_0001>

<llo_original>
// kernel: _lambda_.1
$region0: #{_lambda_.1}
  #allocation0 [shape = 'u32[]', space=smem, size = 0x4, offset = 0x4, fixed_abs, tag = 'smem constant byte address 0x4 - core index']
  #allocation1 [shape = 'u32[144,128]{1,0:T(1,128)}', space=vmem, size = 0x12000, scoped, tag = 'internal scratch']
  %s0 = inlined_call_operand.vmem [shape: f32[128,128], index: 0, kind: input, shape index: {}]
  %s1 = inlined_call_operand.vmem [shape: bf16[128,2], index: 1, kind: input, shape index: {}]
  %s2 = inlined_call_operand.vmem [shape: f32[32,128], index: 2, kind: input, shape index: {}]
  %s3 = inlined_call_operand.vmem [shape: f32[32,1], index: 3, kind: input, shape index: {}]
  %s4 = inlined_call_operand.vmem [shape: f32[32,32], index: 4, kind: input, shape index: {}]
  %s5 = inlined_call_operand.vmem [shape: f32[32,1], index: 5, kind: input, shape index: {}]
  %s6 = inlined_call_operand.vmem [shape: f32[32,256], index: 6, kind: input, shape index: {}]
  %s7 = inlined_call_operand.vmem [shape: f32[32,1], index: 7, kind: input, shape index: {}]
  %s8 = inlined_call_operand.vmem [shape: f32[32,32], index: 8, kind: input, shape index: {}]
  %s9 = inlined_call_operand.vmem [shape: f32[32,1], index: 9, kind: input, shape index: {}]
  %s10 = inlined_call_operand.vmem [shape: f32[4,32], index: 10, kind: input, shape index: {}]
  %s11 = inlined_call_operand.vmem [shape: f32[4,1], index: 11, kind: input, shape index: {}]
  %s12 = inlined_call_operand.vmem [shape: f32[4,2], index: 12, kind: output, shape index: {}]
  %s13 = sld [smem:[#allocation0]]
  $region58: #{_lambda_.1} parent=0
    _
  %s15 = ssub.s32 1, %s13
  %s16 = scalar_select 0, %s15, %s13
  // Predicated region
  $region2: #{_lambda_.1} parent=0 // pred_check
    _
  $region3: #{_lambda_.1} parent=0 // pred_check_branch
    %18 = sbr.rel (0) target = $region5
  $region4: #{_lambda_.1} parent=0 // pred_region
    _
  $region5: #{_lambda_.1} parent=0 // pred_fallthru
    _
  // Predicated region
  $region6: #{_lambda_.1} parent=0 // pred_check
    _
  $region7: #{_lambda_.1} parent=0 // pred_check_branch
    %20 = sbr.rel (0) target = $region9
  $region8: #{_lambda_.1} parent=0 // pred_region
    _
  $region9: #{_lambda_.1} parent=0 // pred_fallthru
    _
  // Predicated region
  $region10: #{_lambda_.1} parent=0 // pred_check
    _
  $region11: #{_lambda_.1} parent=0 // pred_check_branch
    %22 = sbr.rel (0) target = $region13
  $region12: #{_lambda_.1} parent=0 // pred_region
    _
  $region13: #{_lambda_.1} parent=0 // pred_fallthru
    _
  // Predicated region
  $region14: #{_lambda_.1} parent=0 // pred_check
    _
  $region15: #{_lambda_.1} parent=0 // pred_check_branch
    %24 = sbr.rel (0) target = $region17
  $region16: #{_lambda_.1} parent=0 // pred_region
    _
  $region17: #{_lambda_.1} parent=0 // pred_fallthru
    _
  // Predicated region
  $region18: #{_lambda_.1} parent=0 // pred_check
    _
  $region19: #{_lambda_.1} parent=0 // pred_check_branch
    %26 = sbr.rel (0) target = $region21
  $region20: #{_lambda_.1} parent=0 // pred_region
    _
  $region21: #{_lambda_.1} parent=0 // pred_fallthru
    _
  // Predicated region
  $region22: #{_lambda_.1} parent=0 // pred_check
    _
  $region23: #{_lambda_.1} parent=0 // pred_check_branch
    %28 = sbr.rel (0) target = $region25
  $region24: #{_lambda_.1} parent=0 // pred_region
    _
  $region25: #{_lambda_.1} parent=0 // pred_fallthru
    _
  // Predicated region
  $region26: #{_lambda_.1} parent=0 // pred_check
    _
  $region27: #{_lambda_.1} parent=0 // pred_check_branch
    %30 = sbr.rel (0) target = $region29
  $region28: #{_lambda_.1} parent=0 // pred_region
    _
  $region29: #{_lambda_.1} parent=0 // pred_fallthru
    _
  // Predicated region
  $region30: #{_lambda_.1} parent=0 // pred_check
    _
  $region31: #{_lambda_.1} parent=0 // pred_check_branch
    %32 = sbr.rel (0) target = $region33
  $region32: #{_lambda_.1} parent=0 // pred_region
    _
  $region33: #{_lambda_.1} parent=0 // pred_fallthru
    _
  // Predicated region
  $region34: #{_lambda_.1} parent=0 // pred_check
    _
  $region35: #{_lambda_.1} parent=0 // pred_check_branch
    %34 = sbr.rel (0) target = $region37
  $region36: #{_lambda_.1} parent=0 // pred_region
    _
  $region37: #{_lambda_.1} parent=0 // pred_fallthru
    _
  // Predicated region
  $region38: #{_lambda_.1} parent=0 // pred_check
    _
  $region39: #{_lambda_.1} parent=0 // pred_check_branch
    %36 = sbr.rel (0) target = $region41
  $region40: #{_lambda_.1} parent=0 // pred_region
    _
  $region41: #{_lambda_.1} parent=0 // pred_fallthru
    _
  // Predicated region
  $region42: #{_lambda_.1} parent=0 // pred_check
    _
  $region43: #{_lambda_.1} parent=0 // pred_check_branch
    %38 = sbr.rel (0) target = $region45
  $region44: #{_lambda_.1} parent=0 // pred_region
    _
  $region45: #{_lambda_.1} parent=0 // pred_fallthru
    _
  // Predicated region
  $region46: #{_lambda_.1} parent=0 // pred_check
    _
  $region47: #{_lambda_.1} parent=0 // pred_check_branch
    %40 = sbr.rel (0) target = $region49
  $region48: #{_lambda_.1} parent=0 // pred_region
    _
  $region49: #{_lambda_.1} parent=0 // pred_fallthru
    _
  %v42 = vlaneseq
  %v43 = vand.u32 %v42, 127
  %vm44 = vcmp.lt.s32.totalorder %v43, 0
  %v45 = vsub.s32 0, %v43
  %v46 = vsel %vm44, %v45, %v43
  %v47 = vshrl.u32 %v46, 6
  %v48 = vand.u32 %v46, 63
  %v49 = vsub.s32 0, %v48
  %v50 = vsel %vm44, %v49, %v48
  %vm51 = vcmp.ne.s32.totalorder %v50, 0
  %vm52 = vcmp.lt.s32.totalorder %v50, 0
  %vm53 = vmand %vm52, %vm51
  %v54 = vadd.s32 %v50, 64
  %v55 = vsel %vm53, %v54, %v50
  %v56 = vld [vmem:[%s1] sm:$0xf]
  %v57 = vld [vmem:[%s1 + $0x4] sm:$0xf]
  %v58 = vld [vmem:[%s1 + $0x8] sm:$0xf]
  %v59 = vld [vmem:[%s1 + $0xc] sm:$0xf]
  %v60 = vld [vmem:[%s1 + $0x10] sm:$0xf]
  %v61 = vld [vmem:[%s1 + $0x14] sm:$0xf]
  %v62 = vld [vmem:[%s1 + $0x18] sm:$0xf]
  %v63 = vld [vmem:[%s1 + $0x1c] sm:$0xf]
  %v64 = vld [vmem:[%s1 + $0x20] sm:$0xf]
  %v65 = vld [vmem:[%s1 + $0x24] sm:$0xf]
  %v66 = vld [vmem:[%s1 + $0x28] sm:$0xf]
  %v67 = vld [vmem:[%s1 + $0x2c] sm:$0xf]
  %v68 = vld [vmem:[%s1 + $0x30] sm:$0xf]
  %v69 = vld [vmem:[%s1 + $0x34] sm:$0xf]
  %v70 = vld [vmem:[%s1 + $0x38] sm:$0xf]
  %v71 = vld [vmem:[%s1 + $0x3c] sm:$0xf]
  %v72 = vld [vmem:[%s0] sm:$0xff]
  %v73 = vld [vmem:[%s0 + $0x8] sm:$0xff]
  %v74 = vld [vmem:[%s0 + $0x10] sm:$0xff]
  %v75 = vld [vmem:[%s0 + $0x18] sm:$0xff]
  %v76 = vld [vmem:[%s0 + $0x20] sm:$0xff]
  %v77 = vld [vmem:[%s0 + $0x28] sm:$0xff]
  %v78 = vld [vmem:[%s0 + $0x30] sm:$0xff]
  %v79 = vld [vmem:[%s0 + $0x38] sm:$0xff]
  %v80 = vld [vmem:[%s0 + $0x40] sm:$0xff]
  %v81 = vld [vmem:[%s0 + $0x48] sm:$0xff]
  %v82 = vld [vmem:[%s0 + $0x50] sm:$0xff]
  %v83 = vld [vmem:[%s0 + $0x58] sm:$0xff]
  %v84 = vld [vmem:[%s0 + $0x60] sm:$0xff]
  %v85 = vld [vmem:[%s0 + $0x68] sm:$0xff]
  %v86 = vld [vmem:[%s0 + $0x70] sm:$0xff]
  %v87 = vld [vmem:[%s0 + $0x78] sm:$0xff]
  %v88 = vld [vmem:[%s2] sm:$0xff]
  %v89 = vld [vmem:[%s2 + $0x8] sm:$0xff]
  %v90 = vld [vmem:[%s2 + $0x10] sm:$0xff]
  %v91 = vld [vmem:[%s2 + $0x18] sm:$0xff]
  %v92 = vld [vmem:[%s3] sm:$0xff]
  %v93 = vld [vmem:[%s3 + $0x8] sm:$0xff]
  %v94 = vld [vmem:[%s3 + $0x10] sm:$0xff]
  %v95 = vld [vmem:[%s3 + $0x18] sm:$0xff]
  %v96 = vld [vmem:[%s4] sm:$0xff]
  %v97 = vld [vmem:[%s4 + $0x8] sm:$0xff]
  %v98 = vld [vmem:[%s4 + $0x10] sm:$0xff]
  %v99 = vld [vmem:[%s4 + $0x18] sm:$0xff]
  %v100 = vld [vmem:[%s5] sm:$0xff]
  %v101 = vld [vmem:[%s5 + $0x8] sm:$0xff]
  %v102 = vld [vmem:[%s5 + $0x10] sm:$0xff]
  %v103 = vld [vmem:[%s5 + $0x18] sm:$0xff]
  %v104 = vpack.c.bf16 %v89, %v88
  %v105 = vpack.c.bf16 %v91, %v90
  %v106 = vpack.c.bf16 %v73, %v72
  %v107 = vpack.c.bf16 %v75, %v74
  %v108 = vpack.c.bf16 %v77, %v76
  %v109 = vpack.c.bf16 %v79, %v78
  %v110 = vpack.c.bf16 %v81, %v80
  %v111 = vpack.c.bf16 %v83, %v82
  %v112 = vpack.c.bf16 %v85, %v84
  %v113 = vpack.c.bf16 %v87, %v86
  %115 = vset.pattern.permute.xlu0 0
  %116 = vperm.xlu0 %115, %v92
  %v117 = vpop.permute.xlu0 %116
  %120 = vset.pattern.permute.xlu0 0
  %121 = vperm.xlu0 %120, %v93
  %v122 = vpop.permute.xlu0 %121
  %125 = vset.pattern.permute.xlu0 0
  %126 = vperm.xlu0 %125, %v94
  %v127 = vpop.permute.xlu0 %126
  %130 = vset.pattern.permute.xlu0 0
  %131 = vperm.xlu0 %130, %v95
  %v132 = vpop.permute.xlu0 %131
  %134 = vmatprep.subr.bf16.mxu0 0
  %135 = vmatpush1.bf16.msra.mxu0 %v106
  %136 = vmatprep.subr.bf16.mxu0 0
  %137 = vmatpush1.bf16.msra.mxu0 %v107
  %138 = vmatprep.subr.bf16.mxu0 0
  %139 = vmatpush1.bf16.msra.mxu0 %v108
  %140 = vmatprep.subr.bf16.mxu0 0
  %141 = vmatpush1.bf16.msra.mxu0 %v109
  %142 = vmatprep.subr.bf16.mxu0 0
  %143 = vmatpush1.bf16.msra.mxu0 %v110
  %144 = vmatprep.subr.bf16.mxu0 0
  %145 = vmatpush1.bf16.msra.mxu0 %v111
  %146 = vmatprep.subr.bf16.mxu0 0
  %147 = vmatpush1.bf16.msra.mxu0 %v112
  %148 = vmatprep.subr.bf16.mxu0 0
  %149 = vmatpush1.bf16.msra.mxu0 %v113
  %150 = vmatprep.subr.bf16.mxu0 0
  %151 = vmatpush1.bf16.msra.mxu0 0
  %152 = vmatprep.subr.bf16.mxu0 0
  %153 = vmatpush1.bf16.msra.mxu0 0
  %154 = vmatprep.subr.bf16.mxu0 0
  %155 = vmatpush1.bf16.msra.mxu0 0
  %156 = vmatprep.subr.bf16.mxu0 0
  %157 = vmatpush1.bf16.msra.mxu0 0
  %158 = vmatprep.subr.bf16.mxu0 0
  %159 = vmatpush1.bf16.msra.mxu0 0
  %160 = vmatprep.subr.bf16.mxu0 0
  %161 = vmatpush1.bf16.msra.mxu0 0
  %162 = vmatprep.subr.bf16.mxu0 0
  %163 = vmatpush1.bf16.msra.mxu0 0
  %164 = vmatprep.subr.bf16.mxu0 0
  %165 = vmatpush1.bf16.msra.mxu0 0
  %166 = vmatprep.mubr.bf16.mxu0 0
  %167 = vmatmul.mubr.bf16.gmra.mrb[0].mxu0 %v104
  %v168 = vpop.f32.mrb[0].mxu0
  %v169 = vadd.f32 %v117, %v168
  %v170 = vpop.f32.mrb[0].mxu0
  %v171 = vpop.f32.mrb[0].mxu0
  %v172 = vadd.f32 %v122, %v171
  %v173 = vpop.f32.mrb[0].mxu0
  %174 = vmatprep.mubr.bf16.mxu0 0
  %175 = vmatmul.mubr.bf16.gmra.mrb[0].mxu0 %v105
  %v176 = vpop.f32.mrb[0].mxu0
  %v177 = vadd.f32 %v127, %v176
  %v178 = vpop.f32.mrb[0].mxu0
  %v179 = vpop.f32.mrb[0].mxu0
  %v180 = vadd.f32 %v132, %v179
  %v181 = vpop.f32.mrb[0].mxu0
  %182 = vdwg.mxu0
  %v183 = vmax.f32 %v169, 0.0
  %v184 = vmax.f32 %v172, 0.0
  %v185 = vmax.f32 %v177, 0.0
  %v186 = vmax.f32 %v180, 0.0
  %v187 = vpack.c.bf16 %v97, %v96
  %v188 = vpack.c.bf16 %v99, %v98
  %v189 = vpack.c.bf16 %v184, %v183
  %v190 = vpack.c.bf16 %v186, %v185
  %192 = vset.pattern.permute.xlu0 0
  %193 = vperm.xlu0 %192, %v100
  %v194 = vpop.permute.xlu0 %193
  %197 = vset.pattern.permute.xlu0 0
  %198 = vperm.xlu0 %197, %v101
  %v199 = vpop.permute.xlu0 %198
  %202 = vset.pattern.permute.xlu0 0
  %203 = vperm.xlu0 %202, %v102
  %v204 = vpop.permute.xlu0 %203
  %207 = vset.pattern.permute.xlu0 0
  %208 = vperm.xlu0 %207, %v103
  %v209 = vpop.permute.xlu0 %208
  %vm211 = vcmask 261120
  %v213 = vsel %vm211, %v187, 0
  %v216 = vsel %vm211, %v188, 0
  %218 = vmatprep.subr.bf16.mxu0 0
  %219 = vmatpush1.bf16.msra.mxu0 %v189
  %220 = vmatprep.subr.bf16.mxu0 0
  %221 = vmatpush1.bf16.msra.mxu0 %v190
  %222 = vmatprep.subr.bf16.mxu0 0
  %223 = vmatpush1.bf16.msra.mxu0 0
  %224 = vmatprep.subr.bf16.mxu0 0
  %225 = vmatpush1.bf16.msra.mxu0 0
  %226 = vmatprep.subr.bf16.mxu0 0
  %227 = vmatpush1.bf16.msra.mxu0 0
  %228 = vmatprep.subr.bf16.mxu0 0
  %229 = vmatpush1.bf16.msra.mxu0 0
  %230 = vmatprep.subr.bf16.mxu0 0
  %231 = vmatpush1.bf16.msra.mxu0 0
  %232 = vmatprep.subr.bf16.mxu0 0
  %233 = vmatpush1.bf16.msra.mxu0 0
  %234 = vmatprep.subr.bf16.mxu0 0
  %235 = vmatpush1.bf16.msra.mxu0 0
  %236 = vmatprep.subr.bf16.mxu0 0
  %237 = vmatpush1.bf16.msra.mxu0 0
  %238 = vmatprep.subr.bf16.mxu0 0
  %239 = vmatpush1.bf16.msra.mxu0 0
  %240 = vmatprep.subr.bf16.mxu0 0
  %241 = vmatpush1.bf16.msra.mxu0 0
  %242 = vmatprep.subr.bf16.mxu0 0
  %243 = vmatpush1.bf16.msra.mxu0 0
  %244 = vmatprep.subr.bf16.mxu0 0
  %245 = vmatpush1.bf16.msra.mxu0 0
  %246 = vmatprep.subr.bf16.mxu0 0
  %247 = vmatpush1.bf16.msra.mxu0 0
  %248 = vmatprep.subr.bf16.mxu0 0
  %249 = vmatpush1.bf16.msra.mxu0 0
  %250 = vmatprep.mubr.bf16.mxu0 0
  %251 = vmatmul.mubr.bf16.gmra.mrb[0].mxu0 %v213
  %v252 = vpop.f32.mrb[0].mxu0
  %v253 = vadd.f32 %v194, %v252
  %v254 = vpop.f32.mrb[0].mxu0
  %v255 = vpop.f32.mrb[0].mxu0
  %v256 = vadd.f32 %v199, %v255
  %v257 = vpop.f32.mrb[0].mxu0
  %258 = vmatprep.mubr.bf16.mxu0 0
  %259 = vmatmul.mubr.bf16.gmra.mrb[0].mxu0 %v216
  %v260 = vpop.f32.mrb[0].mxu0
  %v261 = vadd.f32 %v204, %v260
  %v262 = vpop.f32.mrb[0].mxu0
  %v263 = vpop.f32.mrb[0].mxu0
  %v264 = vadd.f32 %v209, %v263
  %v265 = vpop.f32.mrb[0].mxu0
  %266 = vdwg.mxu0
  %v267 = vmax.f32 %v253, 0.0
  %v268 = vmax.f32 %v256, 0.0
  %v269 = vmax.f32 %v261, 0.0
  %v270 = vmax.f32 %v264, 0.0
  %271 = vrot.lane.b32.xlu0 %v267, 1
  %v272 = vpop.permute.xlu0 %271
  %273 = vrot.lane.b32.xlu0 %v268, 1
  %v274 = vpop.permute.xlu0 %273
  %275 = vrot.lane.b32.xlu0 %v269, 1
  %v276 = vpop.permute.xlu0 %275
  %277 = vrot.lane.b32.xlu0 %v270, 1
  %v278 = vpop.permute.xlu0 %277
  %vm279 = vcmp.ge.s32.totalorder %v55, 1
  %v280 = vsel %vm279, 1, 0
  %vm281 = vcmp.eq.s32.totalorder %v280, 1
  %v282 = vsel %vm281, %v272, 0.0
  %v283 = vsel %vm281, %v274, 0.0
  %v284 = vsel %vm281, %v276, 0.0
  %v285 = vsel %vm281, %v278, 0.0
  %286 = vrot.lane.b32.xlu0 %v267, 2
  %v287 = vpop.permute.xlu0 %286
  %288 = vrot.lane.b32.xlu0 %v268, 2
  %v289 = vpop.permute.xlu0 %288
  %290 = vrot.lane.b32.xlu0 %v269, 2
  %v291 = vpop.permute.xlu0 %290
  %292 = vrot.lane.b32.xlu0 %v270, 2
  %v293 = vpop.permute.xlu0 %292
  %vm294 = vcmp.ge.s32.totalorder %v55, 2
  %v295 = vsel %vm294, 1, 0
  %vm296 = vcmp.eq.s32.totalorder %v295, 1
  %v297 = vsel %vm296, %v287, 0.0
  %v298 = vsel %vm296, %v289, 0.0
  %v299 = vsel %vm296, %v291, 0.0
  %v300 = vsel %vm296, %v293, 0.0
  %301 = vrot.lane.b32.xlu0 %v267, 3
  %v302 = vpop.permute.xlu0 %301
  %303 = vrot.lane.b32.xlu0 %v268, 3
  %v304 = vpop.permute.xlu0 %303
  %305 = vrot.lane.b32.xlu0 %v269, 3
  %v306 = vpop.permute.xlu0 %305
  %307 = vrot.lane.b32.xlu0 %v270, 3
  %v308 = vpop.permute.xlu0 %307
  %vm309 = vcmp.ge.s32.totalorder %v55, 3
  %v310 = vsel %vm309, 1, 0
  %vm311 = vcmp.eq.s32.totalorder %v310, 1
  %v312 = vsel %vm311, %v302, 0.0
  %v313 = vsel %vm311, %v304, 0.0
  %v314 = vsel %vm311, %v306, 0.0
  %v315 = vsel %vm311, %v308, 0.0
  %316 = vrot.lane.b32.xlu0 %v267, 4
  %v317 = vpop.permute.xlu0 %316
  %318 = vrot.lane.b32.xlu0 %v268, 4
  %v319 = vpop.permute.xlu0 %318
  %320 = vrot.lane.b32.xlu0 %v269, 4
  %v321 = vpop.permute.xlu0 %320
  %322 = vrot.lane.b32.xlu0 %v270, 4
  %v323 = vpop.permute.xlu0 %322
  %vm324 = vcmp.ge.s32.totalorder %v55, 4
  %v325 = vsel %vm324, 1, 0
  %vm326 = vcmp.eq.s32.totalorder %v325, 1
  %v327 = vsel %vm326, %v317, 0.0
  %v328 = vsel %vm326, %v319, 0.0
  %v329 = vsel %vm326, %v321, 0.0
  %v330 = vsel %vm326, %v323, 0.0
  %331 = vrot.lane.b32.xlu0 %v267, 5
  %v332 = vpop.permute.xlu0 %331
  %333 = vrot.lane.b32.xlu0 %v268, 5
  %v334 = vpop.permute.xlu0 %333
  %335 = vrot.lane.b32.xlu0 %v269, 5
  %v336 = vpop.permute.xlu0 %335
  %337 = vrot.lane.b32.xlu0 %v270, 5
  %v338 = vpop.permute.xlu0 %337
  %vm339 = vcmp.ge.s32.totalorder %v55, 5
  %v340 = vsel %vm339, 1, 0
  %vm341 = vcmp.eq.s32.totalorder %v340, 1
  %v342 = vsel %vm341, %v332, 0.0
  %v343 = vsel %vm341, %v334, 0.0
  %v344 = vsel %vm341, %v336, 0.0
  %v345 = vsel %vm341, %v338, 0.0
  %346 = vrot.lane.b32.xlu0 %v267, 6
  %v347 = vpop.permute.xlu0 %346
  %348 = vrot.lane.b32.xlu0 %v268, 6
  %v349 = vpop.permute.xlu0 %348
  %350 = vrot.lane.b32.xlu0 %v269, 6
  %v351 = vpop.permute.xlu0 %350
  %352 = vrot.lane.b32.xlu0 %v270, 6
  %v353 = vpop.permute.xlu0 %352
  %vm354 = vcmp.ge.s32.totalorder %v55, 6
  %v355 = vsel %vm354, 1, 0
  %vm356 = vcmp.eq.s32.totalorder %v355, 1
  %v357 = vsel %vm356, %v347, 0.0
  %v358 = vsel %vm356, %v349, 0.0
  %v359 = vsel %vm356, %v351, 0.0
  %v360 = vsel %vm356, %v353, 0.0
  %361 = vrot.lane.b32.xlu0 %v267, 7
  %v362 = vpop.permute.xlu0 %361
  %363 = vrot.lane.b32.xlu0 %v268, 7
  %v364 = vpop.permute.xlu0 %363
  %365 = vrot.lane.b32.xlu0 %v269, 7
  %v366 = vpop.permute.xlu0 %365
  %367 = vrot.lane.b32.xlu0 %v270, 7
  %v368 = vpop.permute.xlu0 %367
  %vm369 = vcmp.ge.s32.totalorder %v55, 7
  %v370 = vsel %vm369, 1, 0
  %vm371 = vcmp.eq.s32.totalorder %v370, 1
  %v372 = vsel %vm371, %v362, 0.0
  %v373 = vsel %vm371, %v364, 0.0
  %v374 = vsel %vm371, %v366, 0.0
  %v375 = vsel %vm371, %v368, 0.0
  %v376 = vld [vmem:[%s6] sm:$0xff]
  %v377 = vld [vmem:[%s6 + $0x8] sm:$0xff]
  %v378 = vld [vmem:[%s6 + $0x10] sm:$0xff]
  %v379 = vld [vmem:[%s6 + $0x18] sm:$0xff]
  %v380 = vld [vmem:[%s6 + $0x20] sm:$0xff]
  %v381 = vld [vmem:[%s6 + $0x28] sm:$0xff]
  %v382 = vld [vmem:[%s6 + $0x30] sm:$0xff]
  %v383 = vld [vmem:[%s6 + $0x38] sm:$0xff]
  %v384 = vld [vmem:[%s7] sm:$0xff]
  %v385 = vld [vmem:[%s7 + $0x8] sm:$0xff]
  %v386 = vld [vmem:[%s7 + $0x10] sm:$0xff]
  %v387 = vld [vmem:[%s7 + $0x18] sm:$0xff]
  %v388 = vld [vmem:[%s8] sm:$0xff]
  %v389 = vld [vmem:[%s8 + $0x8] sm:$0xff]
  %v390 = vld [vmem:[%s8 + $0x10] sm:$0xff]
  %v391 = vld [vmem:[%s8 + $0x18] sm:$0xff]
  %v392 = vld [vmem:[%s9] sm:$0xff]
  %v393 = vld [vmem:[%s9 + $0x8] sm:$0xff]
  %v394 = vld [vmem:[%s9 + $0x10] sm:$0xff]
  %v395 = vld [vmem:[%s9 + $0x18] sm:$0xff]
  %v396 = vpack.c.bf16 %v268, %v267
  %v397 = vpack.c.bf16 %v270, %v269
  %v398 = vpack.c.bf16 %v283, %v282
  %v399 = vpack.c.bf16 %v285, %v284
  %v400 = vpack.c.bf16 %v298, %v297
  %v401 = vpack.c.bf16 %v300, %v299
  %v402 = vpack.c.bf16 %v313, %v312
  %v403 = vpack.c.bf16 %v315, %v314
  %v404 = vpack.c.bf16 %v328, %v327
  %v405 = vpack.c.bf16 %v330, %v329
  %v406 = vpack.c.bf16 %v343, %v342
  %v407 = vpack.c.bf16 %v345, %v344
  %v408 = vpack.c.bf16 %v358, %v357
  %v409 = vpack.c.bf16 %v360, %v359
  %v410 = vpack.c.bf16 %v373, %v372
  %v411 = vpack.c.bf16 %v375, %v374
  %v428 = vunpack.c.l.b16 %v56
  %v429 = vunpack.c.l.b16 %v57
  %v430 = vunpack.c.l.b16 %v58
  %v431 = vunpack.c.l.b16 %v59
  %v432 = vunpack.c.l.b16 %v60
  %v433 = vunpack.c.l.b16 %v61
  %v434 = vunpack.c.l.b16 %v62
  %v435 = vunpack.c.l.b16 %v63
  %v436 = vunpack.c.l.b16 %v64
  %v437 = vunpack.c.l.b16 %v65
  %v438 = vunpack.c.l.b16 %v66
  %v439 = vunpack.c.l.b16 %v67
  %v440 = vunpack.c.l.b16 %v68
  %v441 = vunpack.c.l.b16 %v69
  %v442 = vunpack.c.l.b16 %v70
  %v443 = vunpack.c.l.b16 %v71
  %v444 = vpack.c.b16 %v429, %v428
  %v445 = vpack.c.b16 %v431, %v430
  %v446 = vpack.c.b16 %v433, %v432
  %v447 = vpack.c.b16 %v435, %v434
  %v448 = vpack.c.b16 %v437, %v436
  %v449 = vpack.c.b16 %v439, %v438
  %v450 = vpack.c.b16 %v441, %v440
  %v451 = vpack.c.b16 %v443, %v442
  %460 = vmatprep.subr.bf16.mxu0 0
  %461 = vmatpush1.bf16.msra.mxu0 %v444
  %462 = vmatprep.subr.bf16.mxu0 0
  %463 = vmatpush1.bf16.msra.mxu0 %v445
  %464 = vmatprep.subr.bf16.mxu0 0
  %465 = vmatpush1.bf16.msra.mxu0 %v446
  %466 = vmatprep.subr.bf16.mxu0 0
  %467 = vmatpush1.bf16.msra.mxu0 %v447
  %468 = vmatprep.subr.bf16.mxu0 0
  %469 = vmatpush1.bf16.msra.mxu0 %v448
  %470 = vmatprep.subr.bf16.mxu0 0
  %471 = vmatpush1.bf16.msra.mxu0 %v449
  %472 = vmatprep.subr.bf16.mxu0 0
  %473 = vmatpush1.bf16.msra.mxu0 %v450
  %474 = vmatprep.subr.bf16.mxu0 0
  %475 = vmatpush1.bf16.msra.mxu0 %v451
  %476 = vmatprep.subr.bf16.mxu0 0
  %477 = vmatpush1.bf16.msra.mxu0 0
  %478 = vmatprep.subr.bf16.mxu0 0
  %479 = vmatpush1.bf16.msra.mxu0 0
  %480 = vmatprep.subr.bf16.mxu0 0
  %481 = vmatpush1.bf16.msra.mxu0 0
  %482 = vmatprep.subr.bf16.mxu0 0
  %483 = vmatpush1.bf16.msra.mxu0 0
  %484 = vmatprep.subr.bf16.mxu0 0
  %485 = vmatpush1.bf16.msra.mxu0 0
  %486 = vmatprep.subr.bf16.mxu0 0
  %487 = vmatpush1.bf16.msra.mxu0 0
  %488 = vmatprep.subr.bf16.mxu0 0
  %489 = vmatpush1.bf16.msra.mxu0 0
  %490 = vmatprep.subr.bf16.mxu0 0
  %491 = vmatpush1.bf16.msra.mxu0 0
  %492 = vmatprep.mubr.bf16.mxu0 0
  %493 = vmatmul.mubr.bf16.gmra.mrb[0].mxu0 %v396
  %v494 = vpop.f32.mrb[0].mxu0
  %v495 = vadd.f32 0.0, %v494
  %v496 = vpop.f32.mrb[0].mxu0
  %v497 = vpop.f32.mrb[0].mxu0
  %v498 = vadd.f32 0.0, %v497
  %v499 = vpop.f32.mrb[0].mxu0
  %500 = vmatprep.mubr.bf16.mxu0 0
  %501 = vmatmul.mubr.bf16.gmra.mrb[0].mxu0 %v397
  %v502 = vpop.f32.mrb[0].mxu0
  %v503 = vadd.f32 0.0, %v502
  %v504 = vpop.f32.mrb[0].mxu0
  %v505 = vpop.f32.mrb[0].mxu0
  %v506 = vadd.f32 0.0, %v505
  %v507 = vpop.f32.mrb[0].mxu0
  %508 = vmatprep.mubr.bf16.mxu0 0
  %509 = vmatmul.mubr.bf16.gmra.mrb[0].mxu0 %v398
  %v510 = vpop.f32.mrb[0].mxu0
  %v511 = vadd.f32 0.0, %v510
  %v512 = vpop.f32.mrb[0].mxu0
  %v513 = vpop.f32.mrb[0].mxu0
  %v514 = vadd.f32 0.0, %v513
  %v515 = vpop.f32.mrb[0].mxu0
  %516 = vmatprep.mubr.bf16.mxu0 0
  %517 = vmatmul.mubr.bf16.gmra.mrb[0].mxu0 %v399
  %v518 = vpop.f32.mrb[0].mxu0
  %v519 = vadd.f32 0.0, %v518
  %v520 = vpop.f32.mrb[0].mxu0
  %v521 = vpop.f32.mrb[0].mxu0
  %v522 = vadd.f32 0.0, %v521
  %v523 = vpop.f32.mrb[0].mxu0
  %524 = vmatprep.mubr.bf16.mxu0 0
  %525 = vmatmul.mubr.bf16.gmra.mrb[0].mxu0 %v400
  %v526 = vpop.f32.mrb[0].mxu0
  %v527 = vadd.f32 0.0, %v526
  %v528 = vpop.f32.mrb[0].mxu0
  %v529 = vpop.f32.mrb[0].mxu0
  %v530 = vadd.f32 0.0, %v529
  %v531 = vpop.f32.mrb[0].mxu0
  %532 = vmatprep.mubr.bf16.mxu0 0
  %533 = vmatmul.mubr.bf16.gmra.mrb[0].mxu0 %v401
  %v534 = vpop.f32.mrb[0].mxu0
  %v535 = vadd.f32 0.0, %v534
  %v536 = vpop.f32.mrb[0].mxu0
  %v537 = vpop.f32.mrb[0].mxu0
  %v538 = vadd.f32 0.0, %v537
  %v539 = vpop.f32.mrb[0].mxu0
  %540 = vmatprep.mubr.bf16.mxu0 0
  %541 = vmatmul.mubr.bf16.gmra.mrb[0].mxu0 %v402
  %v542 = vpop.f32.mrb[0].mxu0
  %v543 = vadd.f32 0.0, %v542
  %v544 = vpop.f32.mrb[0].mxu0
  %v545 = vpop.f32.mrb[0].mxu0
  %v546 = vadd.f32 0.0, %v545
  %v547 = vpop.f32.mrb[0].mxu0
  %548 = vmatprep.mubr.bf16.mxu0 0
  %549 = vmatmul.mubr.bf16.gmra.mrb[0].mxu0 %v403
  %v550 = vpop.f32.mrb[0].mxu0
  %v551 = vadd.f32 0.0, %v550
  %v552 = vpop.f32.mrb[0].mxu0
  %v553 = vpop.f32.mrb[0].mxu0
  %v554 = vadd.f32 0.0, %v553
  %v555 = vpop.f32.mrb[0].mxu0
  %556 = vmatprep.mubr.bf16.mxu0 0
  %557 = vmatmul.mubr.bf16.gmra.mrb[0].mxu0 %v404
  %v558 = vpop.f32.mrb[0].mxu0
  %v559 = vadd.f32 0.0, %v558
  %v560 = vpop.f32.mrb[0].mxu0
  %v561 = vpop.f32.mrb[0].mxu0
  %v562 = vadd.f32 0.0, %v561
  %v563 = vpop.f32.mrb[0].mxu0
  %564 = vmatprep.mubr.bf16.mxu0 0
  %565 = vmatmul.mubr.bf16.gmra.mrb[0].mxu0 %v405
  %v566 = vpop.f32.mrb[0].mxu0
  %v567 = vadd.f32 0.0, %v566
  %v568 = vpop.f32.mrb[0].mxu0
  %v569 = vpop.f32.mrb[0].mxu0
  %v570 = vadd.f32 0.0, %v569
  %v571 = vpop.f32.mrb[0].mxu0
  %572 = vmatprep.mubr.bf16.mxu0 0
  %573 = vmatmul.mubr.bf16.gmra.mrb[0].mxu0 %v406
  %v574 = vpop.f32.mrb[0].mxu0
  %v575 = vadd.f32 0.0, %v574
  %v576 = vpop.f32.mrb[0].mxu0
  %v577 = vpop.f32.mrb[0].mxu0
  %v578 = vadd.f32 0.0, %v577
  %v579 = vpop.f32.mrb[0].mxu0
  %580 = vmatprep.mubr.bf16.mxu0 0
  %581 = vmatmul.mubr.bf16.gmra.mrb[0].mxu0 %v407
  %v582 = vpop.f32.mrb[0].mxu0
  %v583 = vadd.f32 0.0, %v582
  %v584 = vpop.f32.mrb[0].mxu0
  %v585 = vpop.f32.mrb[0].mxu0
  %v586 = vadd.f32 0.0, %v585
  %v587 = vpop.f32.mrb[0].mxu0
  %588 = vmatprep.mubr.bf16.mxu0 0
  %589 = vmatmul.mubr.bf16.gmra.mrb[0].mxu0 %v408
  %v590 = vpop.f32.mrb[0].mxu0
  %v591 = vadd.f32 0.0, %v590
  %v592 = vpop.f32.mrb[0].mxu0
  %v593 = vpop.f32.mrb[0].mxu0
  %v594 = vadd.f32 0.0, %v593
  %v595 = vpop.f32.mrb[0].mxu0
  %596 = vmatprep.mubr.bf16.mxu0 0
  %597 = vmatmul.mubr.bf16.gmra.mrb[0].mxu0 %v409
  %v598 = vpop.f32.mrb[0].mxu0
  %v599 = vadd.f32 0.0, %v598
  %v600 = vpop.f32.mrb[0].mxu0
  %v601 = vpop.f32.mrb[0].mxu0
  %v602 = vadd.f32 0.0, %v601
  %v603 = vpop.f32.mrb[0].mxu0
  %604 = vmatprep.mubr.bf16.mxu0 0
  %605 = vmatmul.mubr.bf16.gmra.mrb[0].mxu0 %v410
  %v606 = vpop.f32.mrb[0].mxu0
  %v607 = vadd.f32 0.0, %v606
  %v608 = vpop.f32.mrb[0].mxu0
  %v609 = vpop.f32.mrb[0].mxu0
  %v610 = vadd.f32 0.0, %v609
  %v611 = vpop.f32.mrb[0].mxu0
  %612 = vmatprep.mubr.bf16.mxu0 0
  %613 = vmatmul.mubr.bf16.gmra.mrb[0].mxu0 %v411
  %v614 = vpop.f32.mrb[0].mxu0
  %v615 = vadd.f32 0.0, %v614
  %v616 = vpop.f32.mrb[0].mxu0
  %v617 = vpop.f32.mrb[0].mxu0
  %v618 = vadd.f32 0.0, %v617
  %v619 = vpop.f32.mrb[0].mxu0
  %620 = vdwg.mxu0
  %v621 = vpack.c.bf16 %v378, %v376
  %v622 = vpack.c.bf16 %v379, %v377
  %v623 = vpack.c.bf16 %v382, %v380
  %v624 = vpack.c.bf16 %v383, %v381
  %v625 = vpack.c.bf16 %v498, %v495
  %v626 = vpack.c.bf16 %v506, %v503
  %v627 = vpack.c.bf16 %v514, %v511
  %v628 = vpack.c.bf16 %v522, %v519
  %v629 = vpack.c.bf16 %v530, %v527
  %v630 = vpack.c.bf16 %v538, %v535
  %v631 = vpack.c.bf16 %v546, %v543
  %v632 = vpack.c.bf16 %v554, %v551
  %v633 = vpack.c.bf16 %v562, %v559
  %v634 = vpack.c.bf16 %v570, %v567
  %v635 = vpack.c.bf16 %v578, %v575
  %v636 = vpack.c.bf16 %v586, %v583
  %v637 = vpack.c.bf16 %v594, %v591
  %v638 = vpack.c.bf16 %v602, %v599
  %v639 = vpack.c.bf16 %v610, %v607
  %v640 = vpack.c.bf16 %v618, %v615
  %642 = vset.pattern.permute.xlu0 0
  %643 = vperm.xlu0 %642, %v384
  %v644 = vpop.permute.xlu0 %643
  %647 = vset.pattern.permute.xlu0 0
  %648 = vperm.xlu0 %647, %v385
  %v649 = vpop.permute.xlu0 %648
  %652 = vset.pattern.permute.xlu0 0
  %653 = vperm.xlu0 %652, %v386
  %v654 = vpop.permute.xlu0 %653
  %657 = vset.pattern.permute.xlu0 0
  %658 = vperm.xlu0 %657, %v387
  %v659 = vpop.permute.xlu0 %658
  %661 = vmatprep.subr.bf16.mxu0 0
  %662 = vmatpush1.bf16.msra.mxu0 %v625
  %663 = vmatprep.subr.bf16.mxu0 0
  %664 = vmatpush1.bf16.msra.mxu0 %v626
  %665 = vmatprep.subr.bf16.mxu0 0
  %666 = vmatpush1.bf16.msra.mxu0 %v627
  %667 = vmatprep.subr.bf16.mxu0 0
  %668 = vmatpush1.bf16.msra.mxu0 %v628
  %669 = vmatprep.subr.bf16.mxu0 0
  %670 = vmatpush1.bf16.msra.mxu0 %v629
  %671 = vmatprep.subr.bf16.mxu0 0
  %672 = vmatpush1.bf16.msra.mxu0 %v630
  %673 = vmatprep.subr.bf16.mxu0 0
  %674 = vmatpush1.bf16.msra.mxu0 %v631
  %675 = vmatprep.subr.bf16.mxu0 0
  %676 = vmatpush1.bf16.msra.mxu0 %v632
  %677 = vmatprep.subr.bf16.mxu0 0
  %678 = vmatpush1.bf16.msra.mxu0 %v633
  %679 = vmatprep.subr.bf16.mxu0 0
  %680 = vmatpush1.bf16.msra.mxu0 %v634
  %681 = vmatprep.subr.bf16.mxu0 0
  %682 = vmatpush1.bf16.msra.mxu0 %v635
  %683 = vmatprep.subr.bf16.mxu0 0
  %684 = vmatpush1.bf16.msra.mxu0 %v636
  %685 = vmatprep.subr.bf16.mxu0 0
  %686 = vmatpush1.bf16.msra.mxu0 %v637
  %687 = vmatprep.subr.bf16.mxu0 0
  %688 = vmatpush1.bf16.msra.mxu0 %v638
  %689 = vmatprep.subr.bf16.mxu0 0
  %690 = vmatpush1.bf16.msra.mxu0 %v639
  %691 = vmatprep.subr.bf16.mxu0 0
  %692 = vmatpush1.bf16.msra.mxu0 %v640
  %693 = vmatprep.mubr.bf16.mxu0 %v622
  %694 = vmatmul.mubr.bf16.gmra.mrb[0].mxu0 %v621
  %v695 = vpop.f32.mrb[0].mxu0
  %v696 = vadd.f32 %v644, %v695
  %v697 = vpop.f32.mrb[0].mxu0
  %v698 = vpop.f32.mrb[0].mxu0
  %v699 = vadd.f32 %v649, %v698
  %v700 = vpop.f32.mrb[0].mxu0
  %701 = vmatprep.mubr.bf16.mxu0 %v624
  %702 = vmatmul.mubr.bf16.gmra.mrb[0].mxu0 %v623
  %v703 = vpop.f32.mrb[0].mxu0
  %v704 = vadd.f32 %v654, %v703
  %v705 = vpop.f32.mrb[0].mxu0
  %v706 = vpop.f32.mrb[0].mxu0
  %v707 = vadd.f32 %v659, %v706
  %v708 = vpop.f32.mrb[0].mxu0
  %709 = vdwg.mxu0
  %v710 = vmax.f32 %v696, 0.0
  %v711 = vmax.f32 %v699, 0.0
  %v712 = vmax.f32 %v704, 0.0
  %v713 = vmax.f32 %v707, 0.0
  %v714 = vpack.c.bf16 %v389, %v388
  %v715 = vpack.c.bf16 %v391, %v390
  %v716 = vpack.c.bf16 %v711, %v710
  %v717 = vpack.c.bf16 %v713, %v712
  %719 = vset.pattern.permute.xlu0 0
  %720 = vperm.xlu0 %719, %v392
  %v721 = vpop.permute.xlu0 %720
  %724 = vset.pattern.permute.xlu0 0
  %725 = vperm.xlu0 %724, %v393
  %v726 = vpop.permute.xlu0 %725
  %729 = vset.pattern.permute.xlu0 0
  %730 = vperm.xlu0 %729, %v394
  %v731 = vpop.permute.xlu0 %730
  %734 = vset.pattern.permute.xlu0 0
  %735 = vperm.xlu0 %734, %v395
  %v736 = vpop.permute.xlu0 %735
  %v739 = vsel %vm211, %v714, 0
  %v742 = vsel %vm211, %v715, 0
  %744 = vmatprep.subr.bf16.mxu0 0
  %745 = vmatpush1.bf16.msra.mxu0 %v716
  %746 = vmatprep.subr.bf16.mxu0 0
  %747 = vmatpush1.bf16.msra.mxu0 %v717
  %748 = vmatprep.subr.bf16.mxu0 0
  %749 = vmatpush1.bf16.msra.mxu0 0
  %750 = vmatprep.subr.bf16.mxu0 0
  %751 = vmatpush1.bf16.msra.mxu0 0
  %752 = vmatprep.subr.bf16.mxu0 0
  %753 = vmatpush1.bf16.msra.mxu0 0
  %754 = vmatprep.subr.bf16.mxu0 0
  %755 = vmatpush1.bf16.msra.mxu0 0
  %756 = vmatprep.subr.bf16.mxu0 0
  %757 = vmatpush1.bf16.msra.mxu0 0
  %758 = vmatprep.subr.bf16.mxu0 0
  %759 = vmatpush1.bf16.msra.mxu0 0
  %760 = vmatprep.subr.bf16.mxu0 0
  %761 = vmatpush1.bf16.msra.mxu0 0
  %762 = vmatprep.subr.bf16.mxu0 0
  %763 = vmatpush1.bf16.msra.mxu0 0
  %764 = vmatprep.subr.bf16.mxu0 0
  %765 = vmatpush1.bf16.msra.mxu0 0
  %766 = vmatprep.subr.bf16.mxu0 0
  %767 = vmatpush1.bf16.msra.mxu0 0
  %768 = vmatprep.subr.bf16.mxu0 0
  %769 = vmatpush1.bf16.msra.mxu0 0
  %770 = vmatprep.subr.bf16.mxu0 0
  %771 = vmatpush1.bf16.msra.mxu0 0
  %772 = vmatprep.subr.bf16.mxu0 0
  %773 = vmatpush1.bf16.msra.mxu0 0
  %774 = vmatprep.subr.bf16.mxu0 0
  %775 = vmatpush1.bf16.msra.mxu0 0
  %776 = vmatprep.mubr.bf16.mxu0 0
  %777 = vmatmul.mubr.bf16.gmra.mrb[0].mxu0 %v739
  %v778 = vpop.f32.mrb[0].mxu0
  %v779 = vadd.f32 %v721, %v778
  %v780 = vpop.f32.mrb[0].mxu0
  %v781 = vpop.f32.mrb[0].mxu0
  %v782 = vadd.f32 %v726, %v781
  %v783 = vpop.f32.mrb[0].mxu0
  %784 = vmatprep.mubr.bf16.mxu0 0
  %785 = vmatmul.mubr.bf16.gmra.mrb[0].mxu0 %v742
  %v786 = vpop.f32.mrb[0].mxu0
  %v787 = vadd.f32 %v731, %v786
  %v788 = vpop.f32.mrb[0].mxu0
  %v789 = vpop.f32.mrb[0].mxu0
  %v790 = vadd.f32 %v736, %v789
  %v791 = vpop.f32.mrb[0].mxu0
  %792 = vdwg.mxu0
  %v793 = vmax.f32 %v779, 0.0
  %v794 = vmax.f32 %v782, 0.0
  %v795 = vmax.f32 %v787, 0.0
  %v796 = vmax.f32 %v790, 0.0
  %v797 = vld [vmem:[%s10] sm:$0xf]
  %v798 = vpack.c.bf16 %v797, %v797
  %v799 = vpack.c.bf16 %v794, %v793
  %v800 = vpack.c.bf16 %v796, %v795
  %v801 = vld [vmem:[%s11] sm:$0xf]
  %803 = vset.pattern.permute.xlu0 0
  %804 = vperm.xlu0 %803, %v801
  %v805 = vpop.permute.xlu0 %804
  %v808 = vsel %vm211, %v798, 0
  %810 = vmatprep.subr.bf16.mxu0 0
  %811 = vmatpush1.bf16.msra.mxu0 %v799
  %812 = vmatprep.subr.bf16.mxu0 0
  %813 = vmatpush1.bf16.msra.mxu0 %v800
  %814 = vmatprep.subr.bf16.mxu0 0
  %815 = vmatpush1.bf16.msra.mxu0 0
  %816 = vmatprep.subr.bf16.mxu0 0
  %817 = vmatpush1.bf16.msra.mxu0 0
  %818 = vmatprep.subr.bf16.mxu0 0
  %819 = vmatpush1.bf16.msra.mxu0 0
  %820 = vmatprep.subr.bf16.mxu0 0
  %821 = vmatpush1.bf16.msra.mxu0 0
  %822 = vmatprep.subr.bf16.mxu0 0
  %823 = vmatpush1.bf16.msra.mxu0 0
  %824 = vmatprep.subr.bf16.mxu0 0
  %825 = vmatpush1.bf16.msra.mxu0 0
  %826 = vmatprep.subr.bf16.mxu0 0
  %827 = vmatpush1.bf16.msra.mxu0 0
  %828 = vmatprep.subr.bf16.mxu0 0
  %829 = vmatpush1.bf16.msra.mxu0 0
  %830 = vmatprep.subr.bf16.mxu0 0
  %831 = vmatpush1.bf16.msra.mxu0 0
  %832 = vmatprep.subr.bf16.mxu0 0
  %833 = vmatpush1.bf16.msra.mxu0 0
  %834 = vmatprep.subr.bf16.mxu0 0
  %835 = vmatpush1.bf16.msra.mxu0 0
  %836 = vmatprep.subr.bf16.mxu0 0
  %837 = vmatpush1.bf16.msra.mxu0 0
  %838 = vmatprep.subr.bf16.mxu0 0
  %839 = vmatpush1.bf16.msra.mxu0 0
  %840 = vmatprep.subr.bf16.mxu0 0
  %841 = vmatpush1.bf16.msra.mxu0 0
  %842 = vmatprep.mubr.bf16.mxu0 0
  %843 = vmatmul.mubr.bf16.gmra.mrb[0].mxu0 %v808
  %v844 = vpop.f32.mrb[0].mxu0
  %v845 = vadd.f32 %v805, %v844
  %v846 = vpop.f32.mrb[0].mxu0
  %v847 = vpop.f32.mrb[0].mxu0
  %v848 = vpop.f32.mrb[0].mxu0
  %849 = vdwg.mxu0
  %vm850 = vcmask 11264
  %851 = vst.msk [vmem:[%s12] sm:$0xf] %vm850, %v845
  // Predicated region
  $region50: #{_lambda_.1} parent=0 // pred_check
    _
  $region51: #{_lambda_.1} parent=0 // pred_check_branch
    %853 = sbr.rel (0) target = $region53
  $region52: #{_lambda_.1} parent=0 // pred_region
    _
  $region53: #{_lambda_.1} parent=0 // pred_fallthru
    _
  // Predicated region
  $region54: #{_lambda_.1} parent=0 // pred_check
    _
  $region55: #{_lambda_.1} parent=0 // pred_check_branch
    %855 = sbr.rel (0) target = $region57
  $region56: #{_lambda_.1} parent=0 // pred_region
    _
  $region57: #{_lambda_.1} parent=0 // pred_fallthru
    _

</llo_original>
